<compile_context>
chip_gen: v6e
topology: v6e:2x2x1
jax: 0.10.0
libtpu: 0.0.40
codegen_flags: <defaults>
</compile_context>

<pallas_src>
import jax
import jax.numpy as jnp
from jax.experimental import pallas as pl
from jax.experimental.pallas import tpu as pltpu


def _round_up(n, m):
    return ((n + m - 1) // m) * m


def mlp_kernel(x_ref, w1_ref, b1_ref, w2_ref, b2_ref, o_ref):
    # Read biases once so the epilogue does a single broadcast per grid step.
    b1 = b1_ref[...]                                   # [1, H] f32
    b2 = b2_ref[...]                                   # [1, A] f32
    # hidden = relu(x @ w1 + b1)   (f32 operands, f32 MXU accumulation)
    h = jnp.dot(x_ref[...], w1_ref[...], preferred_element_type=jnp.float32)
    h = jnp.maximum(h + b1, 0.0)
    # out = hidden @ w2 + b2       (narrow [tb, A] store; masked vst is fine)
    o = jnp.dot(h, w2_ref[...], preferred_element_type=jnp.float32)
    o_ref[...] = (o + b2).astype(o_ref.dtype)


def simple_nn_forward(x, w1, b1, w2, b2, *, block_b=2048):
    """relu(x @ w1 + b1) @ w2 + b2 as a batch-tiled Pallas TPU kernel.

    x : [B, state_dim] f32
    w1: [state_dim, 64], b1: [64] or [1, 64]
    w2: [64, action_size], b2: [action_size] or [1, action_size]
    Returns [B, action_size] f32.
    """
    B, state_dim = x.shape
    H = w1.shape[1]
    A = w2.shape[1]

    x = jnp.asarray(x, jnp.float32)
    w1 = jnp.asarray(w1, jnp.float32)
    w2 = jnp.asarray(w2, jnp.float32)
    b1_2d = jnp.asarray(b1, jnp.float32).reshape(1, H)
    b2_2d = jnp.asarray(b2, jnp.float32).reshape(1, A)

    # Batch tile: as big as the batch allows (per-grid-step overhead ~0.35us and
    # each x tile is tiny), multiple of 8 rows (f32 sublane packing) unless it
    # covers the whole batch. No batch padding: partial last block's output
    # writes are masked by Pallas.
    tb = min(block_b, B)
    if B > 8 * 256:
        # v7x has 2 TensorCores: keep >= ~8 grid steps so both get work and the
        # pipeline has blocks to overlap. No-op for small batches / v5e / v6e.
        tb = min(tb, _round_up(pl.cdiv(B, 8), 8))
    if tb != B:
        tb = max(8, (tb // 8) * 8)
    grid = (pl.cdiv(B, tb),)

    cost = pl.CostEstimate(
        flops=2 * B * (state_dim * H + H * A),
        transcendentals=0,
        bytes_accessed=4 * (B * state_dim + B * A + w1.size + w2.size + H + A),
    )

    return pl.pallas_call(
        mlp_kernel,
        out_shape=jax.ShapeDtypeStruct((B, A), jnp.float32),
        grid_spec=pltpu.PrefetchScalarGridSpec(
            num_scalar_prefetch=0,
            grid=grid,
            in_specs=[
                pl.BlockSpec((tb, state_dim), lambda i: (i, 0)),  # stream x tiles
                pl.BlockSpec(w1.shape, lambda i: (0, 0)),         # VMEM-resident
                pl.BlockSpec(b1_2d.shape, lambda i: (0, 0)),
                pl.BlockSpec(w2.shape, lambda i: (0, 0)),
                pl.BlockSpec(b2_2d.shape, lambda i: (0, 0)),
            ],
            out_specs=pl.BlockSpec((tb, A), lambda i: (i, 0)),     # un-padded out
        ),
        compiler_params=pltpu.CompilerParams(
            # batch tiles are independent -> shard across TCs on v7x
            dimension_semantics=("parallel",)),
        cost_estimate=cost,
    )(x, w1, b1_2d, w2, b2_2d)


def init_params(key, state_dim, hidden, action_size):
    # Mimics nn.Linear's uniform(-1/sqrt(fan_in), 1/sqrt(fan_in)) init.
    k1, k2, k3, k4 = jax.random.split(key, 4)
    s1 = 1.0 / jnp.sqrt(state_dim)
    s2 = 1.0 / jnp.sqrt(hidden)
    w1 = jax.random.uniform(k1, (state_dim, hidden), jnp.float32, -s1, s1)
    b1 = jax.random.uniform(k2, (1, hidden), jnp.float32, -s1, s1)
    w2 = jax.random.uniform(k3, (hidden, action_size), jnp.float32, -s2, s2)
    b2 = jax.random.uniform(k4, (1, action_size), jnp.float32, -s2, s2)
    return w1, b1, w2, b2


if __name__ == "__main__":
    key = jax.random.PRNGKey(0)
    kx, kp = jax.random.split(key)

    batch = 8
    state_dim = 8
    hidden = 64
    action_size = 4

    x = jax.random.normal(kx, (batch, state_dim), jnp.float32)
    w1, b1, w2, b2 = init_params(kp, state_dim, hidden, action_size)

    out = simple_nn_forward(x, w1, b1, w2, b2)
    out = jax.block_until_ready(out)
    assert out.shape == (batch, action_size)

    # Full-f32 PyTorch-equivalent forward (MXU default precision gives
    # ~bf16-level per-product rounding, so keep a modest tolerance).
    ref_f32 = jnp.maximum(x @ w1 + b1, 0.0) @ w2 + b2
    assert jnp.allclose(out, ref_f32, atol=2e-2, rtol=2e-2)

    print("KERNEL_OK")
</pallas_src>

<mosaic_0001>
module attributes {stable_mosaic.version = 11 : i64} {
  func.func @mlp_kernel(%arg0: i32, %arg1: memref<8x8xf32, #tpu.memory_space<vmem>>, %arg2: memref<8x64xf32, #tpu.memory_space<vmem>>, %arg3: memref<1x64xf32, #tpu.memory_space<vmem>>, %arg4: memref<64x4xf32, #tpu.memory_space<vmem>>, %arg5: memref<1x4xf32, #tpu.memory_space<vmem>>, %arg6: memref<8x4xf32, #tpu.memory_space<vmem>>) attributes {dimension_semantics = [#tpu.dimension_semantics<parallel>], iteration_bounds = array<i64: 1>, scalar_prefetch = 0 : i64, scratch_operands = 0 : i64, tpu.core_type = #tpu.core_type<tc>, window_params = [{transform_indices = @transform_0, window_bounds = array<i64: 8, 8>}, {pipeline_mode = #tpu.pipeline_mode<synchronous>, transform_indices = @transform_1, window_bounds = array<i64: 8, 64>}, {pipeline_mode = #tpu.pipeline_mode<synchronous>, transform_indices = @transform_2, window_bounds = array<i64: 1, 64>}, {pipeline_mode = #tpu.pipeline_mode<synchronous>, transform_indices = @transform_3, window_bounds = array<i64: 64, 4>}, {pipeline_mode = #tpu.pipeline_mode<synchronous>, transform_indices = @transform_4, window_bounds = array<i64: 1, 4>}, {transform_indices = @transform_5, window_bounds = array<i64: 8, 4>}]} {
    %c0 = arith.constant 0 : index
    %c0_0 = arith.constant 0 : index
    %0 = vector.load %arg3[%c0, %c0_0] : memref<1x64xf32, #tpu.memory_space<vmem>>, vector<1x64xf32>
    %c0_1 = arith.constant 0 : index
    %c0_2 = arith.constant 0 : index
    %1 = vector.load %arg5[%c0_1, %c0_2] : memref<1x4xf32, #tpu.memory_space<vmem>>, vector<1x4xf32>
    %c0_3 = arith.constant 0 : index
    %c0_4 = arith.constant 0 : index
    %2 = vector.load %arg1[%c0_3, %c0_4] : memref<8x8xf32, #tpu.memory_space<vmem>>, vector<8x8xf32>
    %c0_5 = arith.constant 0 : index
    %c0_6 = arith.constant 0 : index
    %3 = vector.load %arg2[%c0_5, %c0_6] : memref<8x64xf32, #tpu.memory_space<vmem>>, vector<8x64xf32>
    %cst = arith.constant dense<0.000000e+00> : vector<8x64xf32>
    %4 = tpu.matmul %2, %3, %cst {dimension_numbers = #tpu.dot_dimension_numbers<[1], [0], [0], [1], [0, 0, 1, 1], [], []>} : vector<8x8xf32>, vector<8x64xf32>, vector<8x64xf32> -> vector<8x64xf32>
    %5 = vector.broadcast %0 : vector<1x64xf32> to vector<8x64xf32>
    %6 = arith.addf %4, %5 : vector<8x64xf32>
    %cst_7 = arith.constant 0.000000e+00 : f32
    %7 = vector.broadcast %cst_7 : f32 to vector<8x64xf32>
    %8 = arith.maximumf %6, %7 : vector<8x64xf32>
    %c0_8 = arith.constant 0 : index
    %c0_9 = arith.constant 0 : index
    %9 = vector.load %arg4[%c0_8, %c0_9] : memref<64x4xf32, #tpu.memory_space<vmem>>, vector<64x4xf32>
    %cst_10 = arith.constant dense<0.000000e+00> : vector<8x4xf32>
    %10 = tpu.matmul %8, %9, %cst_10 {dimension_numbers = #tpu.dot_dimension_numbers<[1], [0], [0], [1], [0, 0, 1, 1], [], []>} : vector<8x64xf32>, vector<64x4xf32>, vector<8x4xf32> -> vector<8x4xf32>
    %11 = vector.broadcast %1 : vector<1x4xf32> to vector<8x4xf32>
    %12 = arith.addf %10, %11 : vector<8x4xf32>
    %c0_11 = arith.constant 0 : index
    %c0_12 = arith.constant 0 : index
    %13 = vector.load %arg6[%c0_11, %c0_12] : memref<8x4xf32, #tpu.memory_space<vmem>>, vector<8x4xf32>
    tpu.vector_store %arg6[%c0_11, %c0_12], %12 {strides = array<i32>} : memref<8x4xf32, #tpu.memory_space<vmem>>, vector<8x4xf32>,
    return
  }
  func.func @transform_0(%arg0: i32) -> (i32, i32) {
    %c0_i32 = arith.constant 0 : i32
    %c0_i32_0 = arith.constant 0 : i32
    return %arg0, %c0_i32 : i32, i32
  }
  func.func @transform_1(%arg0: i32) -> (i32, i32) {
    %c0_i32 = arith.constant 0 : i32
    %c0_i32_0 = arith.constant 0 : i32
    %c0_i32_1 = arith.constant 0 : i32
    return %c0_i32, %c0_i32_0 : i32, i32
  }
  func.func @transform_2(%arg0: i32) -> (i32, i32) {
    %c0_i32 = arith.constant 0 : i32
    %c0_i32_0 = arith.constant 0 : i32
    %c0_i32_1 = arith.constant 0 : i32
    return %c0_i32, %c0_i32_0 : i32, i32
  }
  func.func @transform_3(%arg0: i32) -> (i32, i32) {
    %c0_i32 = arith.constant 0 : i32
    %c0_i32_0 = arith.constant 0 : i32
    %c0_i32_1 = arith.constant 0 : i32
    return %c0_i32, %c0_i32_0 : i32, i32
  }
  func.func @transform_4(%arg0: i32) -> (i32, i32) {
    %c0_i32 = arith.constant 0 : i32
    %c0_i32_0 = arith.constant 0 : i32
    %c0_i32_1 = arith.constant 0 : i32
    return %c0_i32, %c0_i32_0 : i32, i32
  }
  func.func @transform_5(%arg0: i32) -> (i32, i32) {
    %c0_i32 = arith.constant 0 : i32
    %c0_i32_0 = arith.constant 0 : i32
    return %arg0, %c0_i32 : i32, i32
  }
}

</mosaic_0001>

<llo_original>
// kernel: tpu_custom_call.1
$region0: #{tpu_custom_call.1}
  #allocation0 [shape = 'u32[]', space=smem, size = 0x4, offset = 0x4, fixed_abs, tag = 'smem constant byte address 0x4 - core index']
  #allocation1 [shape = 'u32[144,128]{1,0:T(1,128)}', space=vmem, size = 0x12000, scoped, tag = 'internal scratch']
  %s0 = inlined_call_operand.vmem [shape: f32[8,8], index: 0, kind: input, shape index: {}]
  %s1 = inlined_call_operand.vmem [shape: f32[8,64], index: 1, kind: input, shape index: {}]
  %s2 = inlined_call_operand.vmem [shape: f32[1,64], index: 2, kind: input, shape index: {}]
  %s3 = inlined_call_operand.vmem [shape: f32[64,4], index: 3, kind: input, shape index: {}]
  %s4 = inlined_call_operand.vmem [shape: f32[1,4], index: 4, kind: input, shape index: {}]
  %s5 = inlined_call_operand.vmem [shape: f32[8,4], index: 5, kind: output, shape index: {}]
  %s6 = sld [smem:[#allocation0]]
  $region30: #{tpu_custom_call.1} parent=0
    _
  %s8 = ssub.s32 1, %s6
  %s9 = scalar_select 0, %s8, %s6
  // Predicated region
  $region2: #{tpu_custom_call.1} parent=0 // pred_check
    _
  $region3: #{tpu_custom_call.1} parent=0 // pred_check_branch
    %11 = sbr.rel (0) target = $region5
  $region4: #{tpu_custom_call.1} parent=0 // pred_region
    _
  $region5: #{tpu_custom_call.1} parent=0 // pred_fallthru
    _
  // Predicated region
  $region6: #{tpu_custom_call.1} parent=0 // pred_check
    _
  $region7: #{tpu_custom_call.1} parent=0 // pred_check_branch
    %13 = sbr.rel (0) target = $region9
  $region8: #{tpu_custom_call.1} parent=0 // pred_region
    _
  $region9: #{tpu_custom_call.1} parent=0 // pred_fallthru
    _
  // Predicated region
  $region10: #{tpu_custom_call.1} parent=0 // pred_check
    _
  $region11: #{tpu_custom_call.1} parent=0 // pred_check_branch
    %15 = sbr.rel (0) target = $region13
  $region12: #{tpu_custom_call.1} parent=0 // pred_region
    _
  $region13: #{tpu_custom_call.1} parent=0 // pred_fallthru
    _
  // Predicated region
  $region14: #{tpu_custom_call.1} parent=0 // pred_check
    _
  $region15: #{tpu_custom_call.1} parent=0 // pred_check_branch
    %17 = sbr.rel (0) target = $region17
  $region16: #{tpu_custom_call.1} parent=0 // pred_region
    _
  $region17: #{tpu_custom_call.1} parent=0 // pred_fallthru
    _
  // Predicated region
  $region18: #{tpu_custom_call.1} parent=0 // pred_check
    _
  $region19: #{tpu_custom_call.1} parent=0 // pred_check_branch
    %19 = sbr.rel (0) target = $region21
  $region20: #{tpu_custom_call.1} parent=0 // pred_region
    _
  $region21: #{tpu_custom_call.1} parent=0 // pred_fallthru
    _
  %v20 = vld [vmem:[%s2] sm:$0x1]
  %v21 = vld [vmem:[%s4] sm:$0x1]
  %v22 = vld [vmem:[%s0] sm:$0xff]
  %v23 = vld [vmem:[%s1] sm:$0xff]
  %v25 = vlaneseq
  %v26 = vshrl.u32 %v25, 7
  %v27 = vsub.s32 0, %v26
  %v28 = vrot.slane %v20, %v27
  %vm30 = vcmask 64512
  %v32 = vsel %vm30, %v22, 0
  %34 = vmatprep.subr.mxu0 0.0
  %35 = vmatpush1.msra.mxu0 0.0
  %36 = vmatprep.subr.mxu0 0.0
  %37 = vmatpush1.msra.mxu0 0.0
  %38 = vmatprep.subr.mxu0 0.0
  %39 = vmatpush1.msra.mxu0 0.0
  %40 = vmatprep.subr.mxu0 0.0
  %41 = vmatpush1.msra.mxu0 0.0
  %42 = vmatprep.subr.mxu0 0.0
  %43 = vmatpush1.msra.mxu0 0.0
  %44 = vmatprep.subr.mxu0 0.0
  %45 = vmatpush1.msra.mxu0 0.0
  %46 = vmatprep.subr.mxu0 0.0
  %47 = vmatpush1.msra.mxu0 0.0
  %48 = vmatprep.subr.mxu0 0.0
  %49 = vmatpush1.msra.mxu0 0.0
  %50 = vmatprep.subr.mxu0 0.0
  %51 = vmatpush1.msra.mxu0 0.0
  %52 = vmatprep.subr.mxu0 0.0
  %53 = vmatpush1.msra.mxu0 0.0
  %54 = vmatprep.subr.mxu0 0.0
  %55 = vmatpush1.msra.mxu0 0.0
  %56 = vmatprep.subr.mxu0 0.0
  %57 = vmatpush1.msra.mxu0 0.0
  %58 = vmatprep.subr.mxu0 0.0
  %59 = vmatpush1.msra.mxu0 0.0
  %60 = vmatprep.subr.mxu0 0.0
  %61 = vmatpush1.msra.mxu0 0.0
  %62 = vmatprep.subr.mxu0 0.0
  %63 = vmatpush1.msra.mxu0 0.0
  %64 = vmatprep.subr.mxu0 0.0
  %65 = vmatpush1.msra.mxu0 %v23
  %66 = vmatprep.subr.mxu0 0.0
  %67 = vmatpush2.msra.mxu0 0.0
  %68 = vmatprep.subr.mxu0 0.0
  %69 = vmatpush2.msra.mxu0 0.0
  %70 = vmatprep.subr.mxu0 0.0
  %71 = vmatpush2.msra.mxu0 0.0
  %72 = vmatprep.subr.mxu0 0.0
  %73 = vmatpush2.msra.mxu0 0.0
  %74 = vmatprep.subr.mxu0 0.0
  %75 = vmatpush2.msra.mxu0 0.0
  %76 = vmatprep.subr.mxu0 0.0
  %77 = vmatpush2.msra.mxu0 0.0
  %78 = vmatprep.subr.mxu0 0.0
  %79 = vmatpush2.msra.mxu0 0.0
  %80 = vmatprep.subr.mxu0 0.0
  %81 = vmatpush2.msra.mxu0 0.0
  %82 = vmatprep.subr.mxu0 0.0
  %83 = vmatpush2.msra.mxu0 0.0
  %84 = vmatprep.subr.mxu0 0.0
  %85 = vmatpush2.msra.mxu0 0.0
  %86 = vmatprep.subr.mxu0 0.0
  %87 = vmatpush2.msra.mxu0 0.0
  %88 = vmatprep.subr.mxu0 0.0
  %89 = vmatpush2.msra.mxu0 0.0
  %90 = vmatprep.subr.mxu0 0.0
  %91 = vmatpush2.msra.mxu0 0.0
  %92 = vmatprep.subr.mxu0 0.0
  %93 = vmatpush2.msra.mxu0 0.0
  %94 = vmatprep.subr.mxu0 0.0
  %95 = vmatpush2.msra.mxu0 0.0
  %96 = vmatprep.subr.mxu0 0.0
  %97 = vmatpush2.msra.mxu0 0.0
  %98 = vmatprep.mubr.f32.mxu0 0.0
  %99 = vmatmul.mubr.f32.gmra.mxu0 %v32
  %v100 = vpop.f32.mrf.mxu0
  %v101 = vadd.f32 %v28, %v100
  %v102 = vpop.f32.mrf.mxu0
  %103 = vdwg.mxu0
  %v104 = vmax.f32 %v101, 0.0
  %v105 = vld [vmem:[%s3] sm:$0xff]
  %v106 = vld [vmem:[%s3 + $0x8] sm:$0xff]
  %v107 = vld [vmem:[%s3 + $0x10] sm:$0xff]
  %v108 = vld [vmem:[%s3 + $0x18] sm:$0xff]
  %v109 = vld [vmem:[%s3 + $0x20] sm:$0xff]
  %v110 = vld [vmem:[%s3 + $0x28] sm:$0xff]
  %v111 = vld [vmem:[%s3 + $0x30] sm:$0xff]
  %v112 = vld [vmem:[%s3 + $0x38] sm:$0xff]
  %v114 = vlaneseq
  %v115 = vshrl.u32 %v114, 7
  %v116 = vsub.s32 0, %v115
  %v117 = vrot.slane %v21, %v116
  %vm119 = vcmask 523264
  %v121 = vsel %vm119, %v104, 0
  %123 = vmatprep.subr.mxu0 0.0
  %124 = vmatpush1.msra.mxu0 0.0
  %125 = vmatprep.subr.mxu0 0.0
  %126 = vmatpush1.msra.mxu0 0.0
  %127 = vmatprep.subr.mxu0 0.0
  %128 = vmatpush1.msra.mxu0 0.0
  %129 = vmatprep.subr.mxu0 0.0
  %130 = vmatpush1.msra.mxu0 0.0
  %131 = vmatprep.subr.mxu0 0.0
  %132 = vmatpush1.msra.mxu0 0.0
  %133 = vmatprep.subr.mxu0 0.0
  %134 = vmatpush1.msra.mxu0 0.0
  %135 = vmatprep.subr.mxu0 0.0
  %136 = vmatpush1.msra.mxu0 0.0
  %137 = vmatprep.subr.mxu0 0.0
  %138 = vmatpush1.msra.mxu0 0.0
  %139 = vmatprep.subr.mxu0 0.0
  %140 = vmatpush1.msra.mxu0 %v112
  %141 = vmatprep.subr.mxu0 0.0
  %142 = vmatpush1.msra.mxu0 %v111
  %143 = vmatprep.subr.mxu0 0.0
  %144 = vmatpush1.msra.mxu0 %v110
  %145 = vmatprep.subr.mxu0 0.0
  %146 = vmatpush1.msra.mxu0 %v109
  %147 = vmatprep.subr.mxu0 0.0
  %148 = vmatpush1.msra.mxu0 %v108
  %149 = vmatprep.subr.mxu0 0.0
  %150 = vmatpush1.msra.mxu0 %v107
  %151 = vmatprep.subr.mxu0 0.0
  %152 = vmatpush1.msra.mxu0 %v106
  %153 = vmatprep.subr.mxu0 0.0
  %154 = vmatpush1.msra.mxu0 %v105
  %155 = vmatprep.subr.mxu0 0.0
  %156 = vmatpush2.msra.mxu0 0.0
  %157 = vmatprep.subr.mxu0 0.0
  %158 = vmatpush2.msra.mxu0 0.0
  %159 = vmatprep.subr.mxu0 0.0
  %160 = vmatpush2.msra.mxu0 0.0
  %161 = vmatprep.subr.mxu0 0.0
  %162 = vmatpush2.msra.mxu0 0.0
  %163 = vmatprep.subr.mxu0 0.0
  %164 = vmatpush2.msra.mxu0 0.0
  %165 = vmatprep.subr.mxu0 0.0
  %166 = vmatpush2.msra.mxu0 0.0
  %167 = vmatprep.subr.mxu0 0.0
  %168 = vmatpush2.msra.mxu0 0.0
  %169 = vmatprep.subr.mxu0 0.0
  %170 = vmatpush2.msra.mxu0 0.0
  %171 = vmatprep.subr.mxu0 0.0
  %172 = vmatpush2.msra.mxu0 0.0
  %173 = vmatprep.subr.mxu0 0.0
  %174 = vmatpush2.msra.mxu0 0.0
  %175 = vmatprep.subr.mxu0 0.0
  %176 = vmatpush2.msra.mxu0 0.0
  %177 = vmatprep.subr.mxu0 0.0
  %178 = vmatpush2.msra.mxu0 0.0
  %179 = vmatprep.subr.mxu0 0.0
  %180 = vmatpush2.msra.mxu0 0.0
  %181 = vmatprep.subr.mxu0 0.0
  %182 = vmatpush2.msra.mxu0 0.0
  %183 = vmatprep.subr.mxu0 0.0
  %184 = vmatpush2.msra.mxu0 0.0
  %185 = vmatprep.subr.mxu0 0.0
  %186 = vmatpush2.msra.mxu0 0.0
  %187 = vmatprep.mubr.f32.mxu0 0.0
  %188 = vmatmul.mubr.f32.gmra.mxu0 %v121
  %v189 = vpop.f32.mrf.mxu0
  %v190 = vadd.f32 %v117, %v189
  %v191 = vpop.f32.mrf.mxu0
  %192 = vdwg.mxu0
  %vm193 = vcmask 31744
  %194 = vst.msk [vmem:[%s5] sm:$0xff] %vm193, %v190
  // Predicated region
  $region22: #{tpu_custom_call.1} parent=0 // pred_check
    _
  $region23: #{tpu_custom_call.1} parent=0 // pred_check_branch
    %196 = sbr.rel (0) target = $region25
  $region24: #{tpu_custom_call.1} parent=0 // pred_region
    _
  $region25: #{tpu_custom_call.1} parent=0 // pred_fallthru
    _
  // Predicated region
  $region26: #{tpu_custom_call.1} parent=0 // pred_check
    _
  $region27: #{tpu_custom_call.1} parent=0 // pred_check_branch
    %198 = sbr.rel (0) target = $region29
  $region28: #{tpu_custom_call.1} parent=0 // pred_region
    _
  $region29: #{tpu_custom_call.1} parent=0 // pred_fallthru
    _

</llo_original>
